<compile_context>
chip_gen: v6e
topology: v6e:2x2x1
jax: 0.10.0
libtpu: 0.0.40
codegen_flags: <defaults>
</compile_context>

<pallas_src>
import inspect

import jax
import jax.numpy as jnp
from jax.experimental import pallas as pl
from jax.experimental.pallas import tpu as pltpu

_HIDDEN_ALIGN = 256   # fills the 256-wide MXU on v6e/v7x (128 is enough on v5e)
_SUBLANE = 8

_SUPPORTS_PIPELINE_MODE = (
    hasattr(pl, "Buffered")
    and "pipeline_mode" in inspect.signature(pl.BlockSpec).parameters
)


def _round_up(x, m):
    return ((x + m - 1) // m) * m


def _spec(shape, index_map, *, buffers=None, memory_space=None):
    """BlockSpec helper; `buffers` controls pipeline depth where supported."""
    kwargs = {}
    if memory_space is not None:
        kwargs["memory_space"] = memory_space
    if buffers is not None and _SUPPORTS_PIPELINE_MODE:
        kwargs["pipeline_mode"] = pl.Buffered(buffers)
    return pl.BlockSpec(shape, index_map, **kwargs)


def critic_kernel(s_ref, a_ref, w1s_ref, w1a_ref, b1_ref, w2_ref, b2_ref,
                  w3_ref, b3_ref, o_ref):
    # Fused concat: x @ w1 == state @ w1_s + action @ w1_a  (MXU, f32 accum).
    h1 = (jnp.dot(s_ref[...], w1s_ref[...], preferred_element_type=jnp.float32)
          + jnp.dot(a_ref[...], w1a_ref[...], preferred_element_type=jnp.float32)
          + b1_ref[...])
    h1 = jnp.maximum(h1, 0.0)                                       # ReLU

    # Layer 2: cast the activation back to the weight dtype (bf16 path) so the
    # MXU runs at native throughput; accumulate in f32.
    h2 = jnp.dot(h1.astype(w2_ref.dtype), w2_ref[...],
                 preferred_element_type=jnp.float32) + b2_ref[...]
    h2 = jnp.maximum(h2, 0.0)                                       # ReLU

    # Final Linear(H, 1): VPU multiply + XLU lane reduce (avoids a 1-output-lane
    # MXU pass).  Result is a dense (TB, 1) column -> 4 B/row of HBM writes.
    q = jnp.sum(h2 * w3_ref[...], axis=-1, keepdims=True) + b3_ref[0, 0]
    o_ref[...] = q.astype(o_ref.dtype)


def critic_forward(state, action, params, *, max_batch_tile=1024):
    """state: [B, state_dim], action: [B, action_dim] -> q: [B, 1] (f32)."""
    w1_s, w1_a, b1, w2, b2, w3_row, b3 = params          # prepared / padded
    B, S = state.shape
    A = action.shape[1]
    H = w2.shape[1]                                       # padded hidden
    compute_dtype = w2.dtype

    state = state.astype(compute_dtype)
    action = action.astype(compute_dtype)

    # Batch tiling: TB rows per grid step.  Weights are VMEM-resident, so large
    # tiles just amortize the per-step overhead; activation temporaries
    # (TB x H f32) still fit VMEM comfortably at TB=1024 even on v7x.
    TB = min(max_batch_tile, _round_up(B, _SUBLANE))
    B_pad = _round_up(B, TB)
    if B_pad != B:
        state = jnp.pad(state, ((0, B_pad - B), (0, 0)))
        action = jnp.pad(action, ((0, B_pad - B), (0, 0)))

    num_steps = B_pad // TB
    grid = (num_steps,)
    # Deeper buffering on the only streamed inputs once the grid is long enough
    # to benefit; resident weights/biases are single-buffered.
    stream_buffers = 3 if num_steps >= 4 else None

    const = lambda i: (0, 0)   # weights/biases: same block every step
    tile = lambda i: (i, 0)    # batch-tiled state / action / output

    # Scoped-VMEM budget from actual tile sizes (helps v5e's 16 MiB default).
    itemsize = jnp.dtype(compute_dtype).itemsize
    n_stream = stream_buffers if stream_buffers is not None else 2
    n_weight = 1 if _SUPPORTS_PIPELINE_MODE else 2
    vmem_need = (
        n_weight * ((S + A + H) * H * itemsize + 3 * H * 4)   # weights + biases
        + n_stream * TB * (S + A) * itemsize                  # streamed s/a
        + 3 * TB * H * 4                                      # h1/h2 temporaries
        + 2 * TB * 4                                          # output column
    )
    vmem_limit = int(min(64 << 20, max(32 << 20, int(vmem_need * 1.5) + (2 << 20))))

    out = pl.pallas_call(
        critic_kernel,
        out_shape=jax.ShapeDtypeStruct((B_pad, 1), jnp.float32),
        grid=grid,
        in_specs=[
            _spec((TB, S), tile, buffers=stream_buffers),      # state tile
            _spec((TB, A), tile, buffers=stream_buffers),      # action tile
            _spec((S, H), const, buffers=1),                   # w1_s (resident)
            _spec((A, H), const, buffers=1),                   # w1_a (resident)
            _spec((1, H), const, buffers=1),                   # b1
            _spec((H, H), const, buffers=1),                   # w2 (resident)
            _spec((1, H), const, buffers=1),                   # b2
            _spec((1, H), const, buffers=1),                   # w3 as a row
            _spec((1, 1), const,
                  memory_space=pltpu.MemorySpace.SMEM),        # b3 scalar
        ],
        out_specs=pl.BlockSpec((TB, 1), tile),                 # dense q column
        compiler_params=pltpu.CompilerParams(
            dimension_semantics=("parallel",),                 # 2 TCs on v7x
            vmem_limit_bytes=vmem_limit),
    )(state, action, w1_s, w1_a, b1, w2, b2, w3_row, b3)

    return out[:B]


def init_critic_params(key, state_dim, action_dim, hidden_dim):
    """Deterministic synthetic init (uniform, roughly PyTorch Linear scale).

    Weights are stored as [in_features, out_features] (transposed nn.Linear)."""
    d_in = state_dim + action_dim
    ks = jax.random.split(key, 6)

    def lin(kw, kb, fan_in, fan_out):
        bound = 1.0 / jnp.sqrt(fan_in)
        w = jax.random.uniform(kw, (fan_in, fan_out), jnp.float32, -bound, bound)
        b = jax.random.uniform(kb, (1, fan_out), jnp.float32, -bound, bound)
        return w, b

    w1, b1 = lin(ks[0], ks[1], d_in, hidden_dim)
    w2, b2 = lin(ks[2], ks[3], hidden_dim, hidden_dim)
    w3, b3 = lin(ks[4], ks[5], hidden_dim, 1)
    return (w1, b1, w2, b2, w3, b3)


def prepare_critic_params(params, state_dim, *, compute_dtype=jnp.bfloat16,
                          hidden_align=_HIDDEN_ALIGN):
    """One-time param prep for the kernel:
       * split w1 by state/action rows (fuses the concat),
       * zero-pad the hidden dim to a multiple of `hidden_align` (exact:
         ReLU(0)=0 and padded w2 rows / w3 entries are 0),
       * cast matmul weights to `compute_dtype` (bf16 = MXU-native); biases and
         the final-layer row stay f32 (they feed f32 accumulators / VPU),
       * reshape w3 to a [1, H_pad] row for the VPU reduce, b3 to (1,1) SMEM."""
    w1, b1, w2, b2, w3, b3 = params
    h = w1.shape[1]
    ph = _round_up(h, hidden_align) - h

    w1_s = jnp.pad(w1[:state_dim], ((0, 0), (0, ph))).astype(compute_dtype)
    w1_a = jnp.pad(w1[state_dim:], ((0, 0), (0, ph))).astype(compute_dtype)
    b1_p = jnp.pad(b1, ((0, 0), (0, ph))).astype(jnp.float32)
    w2_p = jnp.pad(w2, ((0, ph), (0, ph))).astype(compute_dtype)
    b2_p = jnp.pad(b2, ((0, 0), (0, ph))).astype(jnp.float32)
    w3_row = jnp.pad(w3.reshape(1, h), ((0, 0), (0, ph))).astype(jnp.float32)
    b3_s = b3.reshape(1, 1).astype(jnp.float32)
    return (w1_s, w1_a, b1_p, w2_p, b2_p, w3_row, b3_s)


def critic_reference(state, action, params):
    w1, b1, w2, b2, w3, b3 = params
    x = jnp.concatenate([state, action], axis=-1).astype(jnp.float32)
    h1 = jnp.maximum(x @ w1 + b1, 0.0)
    h2 = jnp.maximum(h1 @ w2 + b2, 0.0)
    return h2 @ w3 + b3


if __name__ == "__main__":
    B, STATE_DIM, ACTION_DIM, HIDDEN = 8, 12, 4, 32

    key = jax.random.PRNGKey(0)
    k_state, k_action, k_params = jax.random.split(key, 3)

    state = jax.random.normal(k_state, (B, STATE_DIM), jnp.float32)
    action = jax.random.normal(k_action, (B, ACTION_DIM), jnp.float32)
    raw_params = init_critic_params(k_params, STATE_DIM, ACTION_DIM, HIDDEN)

    q_ref = critic_reference(state, action, raw_params)

    # f32 validation path (tight tolerance).
    params_f32 = prepare_critic_params(raw_params, STATE_DIM,
                                       compute_dtype=jnp.float32)
    q_f32 = jax.block_until_ready(critic_forward(state, action, params_f32))
    assert q_f32.shape == (B, 1), q_f32.shape
    assert jnp.allclose(q_f32, q_ref, atol=2e-5, rtol=2e-5), \
        "f32 kernel mismatch vs reference"

    # bf16 production path (MXU-native matmuls, f32 accumulation).
    params_bf16 = prepare_critic_params(raw_params, STATE_DIM,
                                        compute_dtype=jnp.bfloat16)
    q_bf16 = jax.block_until_ready(critic_forward(state, action, params_bf16))
    assert q_bf16.shape == (B, 1), q_bf16.shape
    assert jnp.allclose(q_bf16, q_ref, atol=2e-2, rtol=2e-2), \
        "bf16 kernel mismatch vs reference"

    print("KERNEL_OK")
</pallas_src>

<mosaic_0001>
module attributes {stable_mosaic.version = 11 : i64} {
  func.func @critic_kernel(%arg0: i32, %arg1: memref<8x12xf32, #tpu.memory_space<vmem>>, %arg2: memref<8x4xf32, #tpu.memory_space<vmem>>, %arg3: memref<12x256xf32, #tpu.memory_space<vmem>>, %arg4: memref<4x256xf32, #tpu.memory_space<vmem>>, %arg5: memref<1x256xf32, #tpu.memory_space<vmem>>, %arg6: memref<256x256xf32, #tpu.memory_space<vmem>>, %arg7: memref<1x256xf32, #tpu.memory_space<vmem>>, %arg8: memref<1x256xf32, #tpu.memory_space<vmem>>, %arg9: memref<1x1xf32, #tpu.memory_space<smem>>, %arg10: memref<8x1xf32, #tpu.memory_space<vmem>>) attributes {dimension_semantics = [#tpu.dimension_semantics<parallel>], iteration_bounds = array<i64: 1>, scalar_prefetch = 0 : i64, scratch_operands = 0 : i64, tpu.core_type = #tpu.core_type<tc>, window_params = [{transform_indices = @transform_0, window_bounds = array<i64: 8, 12>}, {transform_indices = @transform_1, window_bounds = array<i64: 8, 4>}, {pipeline_mode = #tpu.pipeline_mode<synchronous>, transform_indices = @transform_2, window_bounds = array<i64: 12, 256>}, {pipeline_mode = #tpu.pipeline_mode<synchronous>, transform_indices = @transform_3, window_bounds = array<i64: 4, 256>}, {pipeline_mode = #tpu.pipeline_mode<synchronous>, transform_indices = @transform_4, window_bounds = array<i64: 1, 256>}, {pipeline_mode = #tpu.pipeline_mode<synchronous>, transform_indices = @transform_5, window_bounds = array<i64: 256, 256>}, {pipeline_mode = #tpu.pipeline_mode<synchronous>, transform_indices = @transform_6, window_bounds = array<i64: 1, 256>}, {pipeline_mode = #tpu.pipeline_mode<synchronous>, transform_indices = @transform_7, window_bounds = array<i64: 1, 256>}, {transform_indices = @transform_8, window_bounds = array<i64: 1, 1>}, {transform_indices = @transform_9, window_bounds = array<i64: 8, 1>}]} {
    %c0 = arith.constant 0 : index
    %c0_0 = arith.constant 0 : index
    %0 = vector.load %arg1[%c0, %c0_0] : memref<8x12xf32, #tpu.memory_space<vmem>>, vector<8x12xf32>
    %c0_1 = arith.constant 0 : index
    %c0_2 = arith.constant 0 : index
    %1 = vector.load %arg3[%c0_1, %c0_2] : memref<12x256xf32, #tpu.memory_space<vmem>>, vector<12x256xf32>
    %cst = arith.constant dense<0.000000e+00> : vector<8x256xf32>
    %2 = tpu.matmul %0, %1, %cst {dimension_numbers = #tpu.dot_dimension_numbers<[1], [0], [0], [1], [0, 0, 1, 1], [], []>} : vector<8x12xf32>, vector<12x256xf32>, vector<8x256xf32> -> vector<8x256xf32>
    %c0_3 = arith.constant 0 : index
    %c0_4 = arith.constant 0 : index
    %3 = vector.load %arg2[%c0_3, %c0_4] : memref<8x4xf32, #tpu.memory_space<vmem>>, vector<8x4xf32>
    %c0_5 = arith.constant 0 : index
    %c0_6 = arith.constant 0 : index
    %4 = vector.load %arg4[%c0_5, %c0_6] : memref<4x256xf32, #tpu.memory_space<vmem>>, vector<4x256xf32>
    %cst_7 = arith.constant dense<0.000000e+00> : vector<8x256xf32>
    %5 = tpu.matmul %3, %4, %cst_7 {dimension_numbers = #tpu.dot_dimension_numbers<[1], [0], [0], [1], [0, 0, 1, 1], [], []>} : vector<8x4xf32>, vector<4x256xf32>, vector<8x256xf32> -> vector<8x256xf32>
    %6 = arith.addf %2, %5 : vector<8x256xf32>
    %c0_8 = arith.constant 0 : index
    %c0_9 = arith.constant 0 : index
    %7 = vector.load %arg5[%c0_8, %c0_9] : memref<1x256xf32, #tpu.memory_space<vmem>>, vector<1x256xf32>
    %8 = vector.broadcast %7 : vector<1x256xf32> to vector<8x256xf32>
    %9 = arith.addf %6, %8 : vector<8x256xf32>
    %cst_10 = arith.constant 0.000000e+00 : f32
    %10 = vector.broadcast %cst_10 : f32 to vector<8x256xf32>
    %11 = arith.maximumf %9, %10 : vector<8x256xf32>
    %c0_11 = arith.constant 0 : index
    %c0_12 = arith.constant 0 : index
    %12 = vector.load %arg6[%c0_11, %c0_12] : memref<256x256xf32, #tpu.memory_space<vmem>>, vector<256x256xf32>
    %cst_13 = arith.constant dense<0.000000e+00> : vector<8x256xf32>
    %13 = tpu.matmul %11, %12, %cst_13 {dimension_numbers = #tpu.dot_dimension_numbers<[1], [0], [0], [1], [0, 0, 1, 1], [], []>} : vector<8x256xf32>, vector<256x256xf32>, vector<8x256xf32> -> vector<8x256xf32>
    %c0_14 = arith.constant 0 : index
    %c0_15 = arith.constant 0 : index
    %14 = vector.load %arg7[%c0_14, %c0_15] : memref<1x256xf32, #tpu.memory_space<vmem>>, vector<1x256xf32>
    %15 = vector.broadcast %14 : vector<1x256xf32> to vector<8x256xf32>
    %16 = arith.addf %13, %15 : vector<8x256xf32>
    %cst_16 = arith.constant 0.000000e+00 : f32
    %17 = vector.broadcast %cst_16 : f32 to vector<8x256xf32>
    %18 = arith.maximumf %16, %17 : vector<8x256xf32>
    %c0_17 = arith.constant 0 : index
    %c0_18 = arith.constant 0 : index
    %19 = vector.load %arg8[%c0_17, %c0_18] : memref<1x256xf32, #tpu.memory_space<vmem>>, vector<1x256xf32>
    %20 = vector.broadcast %19 : vector<1x256xf32> to vector<8x256xf32>
    %21 = arith.mulf %18, %20 : vector<8x256xf32>
    %cst_19 = arith.constant dense<0.000000e+00> : vector<8xf32>
    %22 = vector.multi_reduction <add>, %21, %cst_19 [1] : vector<8x256xf32> to vector<8xf32>
    %23 = vector.shape_cast %22 : vector<8xf32> to vector<8x1xf32>
    %c0_20 = arith.constant 0 : index
    %c0_21 = arith.constant 0 : index
    %24 = memref.load %arg9[%c0_20, %c0_21] : memref<1x1xf32, #tpu.memory_space<smem>>
    %25 = vector.broadcast %24 : f32 to vector<8x1xf32>
    %26 = arith.addf %23, %25 : vector<8x1xf32>
    %c0_22 = arith.constant 0 : index
    %c0_23 = arith.constant 0 : index
    %27 = vector.load %arg10[%c0_22, %c0_23] : memref<8x1xf32, #tpu.memory_space<vmem>>, vector<8x1xf32>
    tpu.vector_store %arg10[%c0_22, %c0_23], %26 {strides = array<i32>} : memref<8x1xf32, #tpu.memory_space<vmem>>, vector<8x1xf32>,
    return
  }
  func.func @transform_0(%arg0: i32) -> (i32, i32) {
    %c0_i32 = arith.constant 0 : i32
    %c0_i32_0 = arith.constant 0 : i32
    return %arg0, %c0_i32 : i32, i32
  }
  func.func @transform_1(%arg0: i32) -> (i32, i32) {
    %c0_i32 = arith.constant 0 : i32
    %c0_i32_0 = arith.constant 0 : i32
    return %arg0, %c0_i32 : i32, i32
  }
  func.func @transform_2(%arg0: i32) -> (i32, i32) {
    %c0_i32 = arith.constant 0 : i32
    %c0_i32_0 = arith.constant 0 : i32
    %c0_i32_1 = arith.constant 0 : i32
    return %c0_i32, %c0_i32_0 : i32, i32
  }
  func.func @transform_3(%arg0: i32) -> (i32, i32) {
    %c0_i32 = arith.constant 0 : i32
    %c0_i32_0 = arith.constant 0 : i32
    %c0_i32_1 = arith.constant 0 : i32
    return %c0_i32, %c0_i32_0 : i32, i32
  }
  func.func @transform_4(%arg0: i32) -> (i32, i32) {
    %c0_i32 = arith.constant 0 : i32
    %c0_i32_0 = arith.constant 0 : i32
    %c0_i32_1 = arith.constant 0 : i32
    return %c0_i32, %c0_i32_0 : i32, i32
  }
  func.func @transform_5(%arg0: i32) -> (i32, i32) {
    %c0_i32 = arith.constant 0 : i32
    %c0_i32_0 = arith.constant 0 : i32
    %c0_i32_1 = arith.constant 0 : i32
    return %c0_i32, %c0_i32_0 : i32, i32
  }
  func.func @transform_6(%arg0: i32) -> (i32, i32) {
    %c0_i32 = arith.constant 0 : i32
    %c0_i32_0 = arith.constant 0 : i32
    %c0_i32_1 = arith.constant 0 : i32
    return %c0_i32, %c0_i32_0 : i32, i32
  }
  func.func @transform_7(%arg0: i32) -> (i32, i32) {
    %c0_i32 = arith.constant 0 : i32
    %c0_i32_0 = arith.constant 0 : i32
    %c0_i32_1 = arith.constant 0 : i32
    return %c0_i32, %c0_i32_0 : i32, i32
  }
  func.func @transform_8(%arg0: i32) -> (i32, i32) {
    %c0_i32 = arith.constant 0 : i32
    %c0_i32_0 = arith.constant 0 : i32
    %c0_i32_1 = arith.constant 0 : i32
    return %c0_i32, %c0_i32_0 : i32, i32
  }
  func.func @transform_9(%arg0: i32) -> (i32, i32) {
    %c0_i32 = arith.constant 0 : i32
    %c0_i32_0 = arith.constant 0 : i32
    return %arg0, %c0_i32 : i32, i32
  }
}

</mosaic_0001>

<llo_original>
// kernel: tpu_custom_call.1
$region0: #{tpu_custom_call.1}
  #allocation0 [shape = 'u32[]', space=smem, size = 0x4, offset = 0x4, fixed_abs, tag = 'smem constant byte address 0x4 - core index']
  #allocation1 [shape = 'u32[144,128]{1,0:T(1,128)}', space=vmem, size = 0x12000, scoped, tag = 'internal scratch']
  #allocation2 [shape = 'f32[1,1]{1,0:T(1,128)S(6)}', space=smem, size = 0x200, scoped, tag = 'scoped memory for tpu_custom_call.1']
  %s0 = inlined_call_operand.vmem [shape: f32[8,12], index: 0, kind: input, shape index: {}]
  %s1 = inlined_call_operand.vmem [shape: f32[8,4], index: 1, kind: input, shape index: {}]
  %s2 = inlined_call_operand.hbm [shape: f32[12,256], index: 2, kind: input, shape index: {}]
  %s3 = inlined_call_operand.vmem [shape: f32[4,256], index: 3, kind: input, shape index: {}]
  %s4 = inlined_call_operand.vmem [shape: f32[1,256], index: 4, kind: input, shape index: {}]
  %s5 = inlined_call_operand.hbm [shape: f32[256,256], index: 5, kind: input, shape index: {}]
  %s6 = inlined_call_operand.vmem [shape: f32[1,256], index: 6, kind: input, shape index: {}]
  %s7 = inlined_call_operand.vmem [shape: f32[1,256], index: 7, kind: input, shape index: {}]
  %s8 = inlined_call_operand.<no memory space> [shape: f32[1,1], index: 8, kind: input, shape index: {}]
  %s9 = inlined_call_operand.vmem [shape: f32[8,1], index: 9, kind: output, shape index: {}]
  %s10 = sld [smem:[#allocation0]]
  $region54: #{tpu_custom_call.1} parent=0
    _
  %s12 = ssub.s32 1, %s10
  %s13 = scalar_select 0, %s12, %s10
  %14 = sst [smem:[#allocation2]] %s8
  $region1: #{tpu_custom_call.1} parent=0
    #allocation3 [shape = 'u8[16384]{0}', space=vmem, size = 0x4000, scoped, tag = 'input window, operand 2, single buffered']
    #allocation4 [shape = 's32[1]{0}', space=sflag, size = 0x4, scoped, tag = 'scoped memory for tpu_custom_call.1']
    #allocation5 [shape = 'u8[262144]{0}', space=vmem, size = 0x40000, scoped, tag = 'input window, operand 5, single buffered']
    #allocation6 [shape = 's32[1]{0}', space=sflag, size = 0x4, scoped, tag = 'scoped memory for tpu_custom_call.1']
    %15 = vsyncpa [#allocation4], 0
    %16 = vsyncpa [#allocation6], 0
    // Predicated region
    $region2: #{tpu_custom_call.1} parent=1 // pred_check
      _
    $region3: #{tpu_custom_call.1} parent=1 // pred_check_branch
      %18 = sbr.rel (0) target = $region5
    $region4: #{tpu_custom_call.1} parent=1 // pred_region
      _
    $region5: #{tpu_custom_call.1} parent=1 // pred_fallthru
      _
    // Predicated region
    $region6: #{tpu_custom_call.1} parent=1 // pred_check
      _
    $region7: #{tpu_custom_call.1} parent=1 // pred_check_branch
      %20 = sbr.rel (0) target = $region9
    $region8: #{tpu_custom_call.1} parent=1 // pred_region
      _
    $region9: #{tpu_custom_call.1} parent=1 // pred_fallthru
      _
    // Predicated region
    $region10: #{tpu_custom_call.1} parent=1 // pred_check
      _
    $region11: #{tpu_custom_call.1} parent=1 // pred_check_branch
      %22 = sbr.rel (0) target = $region13
    $region12: #{tpu_custom_call.1} parent=1 // pred_region
      %s24 = ssub.s32 512, 512
      %25 = vsyncadd [#allocation4], %s24
      %s26 = sshll.u32 [#allocation3], 4
      %s27 = int_to_ptr.vmem [resolvable:$true] %s26
      %32 = dma.hbm_to_vmem [thread:$0]  %s2, 512, %s27, [#allocation4], 256, 256, 16
    $region13: #{tpu_custom_call.1} parent=1 // pred_fallthru
      _
    // Predicated region
    $region14: #{tpu_custom_call.1} parent=1 // pred_check
      _
    $region15: #{tpu_custom_call.1} parent=1 // pred_check_branch
      %34 = sbr.rel (0) target = $region17
    $region16: #{tpu_custom_call.1} parent=1 // pred_region
      _
    $region17: #{tpu_custom_call.1} parent=1 // pred_fallthru
      _
    // Predicated region
    $region18: #{tpu_custom_call.1} parent=1 // pred_check
      _
    $region19: #{tpu_custom_call.1} parent=1 // pred_check_branch
      %36 = sbr.rel (0) target = $region21
    $region20: #{tpu_custom_call.1} parent=1 // pred_region
      _
    $region21: #{tpu_custom_call.1} parent=1 // pred_fallthru
      _
    // Predicated region
    $region22: #{tpu_custom_call.1} parent=1 // pred_check
      _
    $region23: #{tpu_custom_call.1} parent=1 // pred_check_branch
      %38 = sbr.rel (0) target = $region25
    $region24: #{tpu_custom_call.1} parent=1 // pred_region
      %s40 = ssub.s32 8192, 8192
      %41 = vsyncadd [#allocation6], %s40
      %s42 = sshll.u32 [#allocation5], 4
      %s43 = int_to_ptr.vmem [resolvable:$true] %s42
      %48 = dma.hbm_to_vmem [thread:$0]  %s5, 8192, %s43, [#allocation6], 256, 256, 16
    $region25: #{tpu_custom_call.1} parent=1 // pred_fallthru
      _
    // Predicated region
    $region26: #{tpu_custom_call.1} parent=1 // pred_check
      _
    $region27: #{tpu_custom_call.1} parent=1 // pred_check_branch
      %50 = sbr.rel (0) target = $region29
    $region28: #{tpu_custom_call.1} parent=1 // pred_region
      _
    $region29: #{tpu_custom_call.1} parent=1 // pred_fallthru
      _
    // Predicated region
    $region30: #{tpu_custom_call.1} parent=1 // pred_check
      _
    $region31: #{tpu_custom_call.1} parent=1 // pred_check_branch
      %52 = sbr.rel (0) target = $region33
    $region32: #{tpu_custom_call.1} parent=1 // pred_region
      _
    $region33: #{tpu_custom_call.1} parent=1 // pred_fallthru
      _
    // Predicated region
    $region34: #{tpu_custom_call.1} parent=1 // pred_check
      _
    $region35: #{tpu_custom_call.1} parent=1 // pred_check_branch
      %54 = sbr.rel (0) target = $region37
    $region36: #{tpu_custom_call.1} parent=1 // pred_region
      _
    $region37: #{tpu_custom_call.1} parent=1 // pred_fallthru
      _
    // Predicated region
    $region38: #{tpu_custom_call.1} parent=1 // pred_check
      _
    $region39: #{tpu_custom_call.1} parent=1 // pred_check_branch
      %56 = sbr.rel (0) target = $region41
    $region40: #{tpu_custom_call.1} parent=1 // pred_region
      %57 = dma.done [#allocation4], 512
    $region41: #{tpu_custom_call.1} parent=1 // pred_fallthru
      _
    // Predicated region
    $region42: #{tpu_custom_call.1} parent=1 // pred_check
      _
    $region43: #{tpu_custom_call.1} parent=1 // pred_check_branch
      %59 = sbr.rel (0) target = $region45
    $region44: #{tpu_custom_call.1} parent=1 // pred_region
      %60 = dma.done [#allocation6], 8192
    $region45: #{tpu_custom_call.1} parent=1 // pred_fallthru
      _
    %v61 = vld [vmem:[%s0] sm:$0xff]
    %v62 = vld [vmem:[#allocation3] sm:$0xff]
    %v63 = vld [vmem:[#allocation3 + $0x8] sm:$0xff]
    %v64 = vld [vmem:[#allocation3 + $0x10] sm:$0xf]
    %v65 = vld [vmem:[#allocation3 + $0x18] sm:$0xf]
    %v66 = vld [vmem:[%s1] sm:$0xff]
    %v67 = vld [vmem:[%s3] sm:$0xff]
    %v69 = vcombine.high %v67, %v67
    %vm70 = vcmask 31744
    %v72 = vsel %vm70, %v66, 0
    %vm74 = vcmask 1043456
    %v75 = vsel %vm74, %v67, 0
    %v77 = vsel %vm74, %v69, 0
    %79 = vmatprep.subr.mxu0 0.0
    %80 = vmatpush1.msra.mxu0 0.0
    %81 = vmatprep.subr.mxu0 0.0
    %82 = vmatpush1.msra.mxu0 0.0
    %83 = vmatprep.subr.mxu0 0.0
    %84 = vmatpush1.msra.mxu0 0.0
    %85 = vmatprep.subr.mxu0 0.0
    %86 = vmatpush1.msra.mxu0 0.0
    %87 = vmatprep.subr.mxu0 0.0
    %88 = vmatpush1.msra.mxu0 0.0
    %89 = vmatprep.subr.mxu0 0.0
    %90 = vmatpush1.msra.mxu0 0.0
    %91 = vmatprep.subr.mxu0 0.0
    %92 = vmatpush1.msra.mxu0 0.0
    %93 = vmatprep.subr.mxu0 0.0
    %94 = vmatpush1.msra.mxu0 0.0
    %95 = vmatprep.subr.mxu0 0.0
    %96 = vmatpush1.msra.mxu0 0.0
    %97 = vmatprep.subr.mxu0 0.0
    %98 = vmatpush1.msra.mxu0 0.0
    %99 = vmatprep.subr.mxu0 0.0
    %100 = vmatpush1.msra.mxu0 0.0
    %101 = vmatprep.subr.mxu0 0.0
    %102 = vmatpush1.msra.mxu0 0.0
    %103 = vmatprep.subr.mxu0 0.0
    %104 = vmatpush1.msra.mxu0 0.0
    %105 = vmatprep.subr.mxu0 0.0
    %106 = vmatpush1.msra.mxu0 0.0
    %107 = vmatprep.subr.mxu0 0.0
    %108 = vmatpush1.msra.mxu0 0.0
    %109 = vmatprep.subr.mxu0 %v77
    %110 = vmatpush1.msra.mxu0 %v75
    %111 = vmatprep.subr.mxu0 0.0
    %112 = vmatpush2.msra.mxu0 0.0
    %113 = vmatprep.subr.mxu0 0.0
    %114 = vmatpush2.msra.mxu0 0.0
    %115 = vmatprep.subr.mxu0 0.0
    %116 = vmatpush2.msra.mxu0 0.0
    %117 = vmatprep.subr.mxu0 0.0
    %118 = vmatpush2.msra.mxu0 0.0
    %119 = vmatprep.subr.mxu0 0.0
    %120 = vmatpush2.msra.mxu0 0.0
    %121 = vmatprep.subr.mxu0 0.0
    %122 = vmatpush2.msra.mxu0 0.0
    %123 = vmatprep.subr.mxu0 0.0
    %124 = vmatpush2.msra.mxu0 0.0
    %125 = vmatprep.subr.mxu0 0.0
    %126 = vmatpush2.msra.mxu0 0.0
    %127 = vmatprep.subr.mxu0 0.0
    %128 = vmatpush2.msra.mxu0 0.0
    %129 = vmatprep.subr.mxu0 0.0
    %130 = vmatpush2.msra.mxu0 0.0
    %131 = vmatprep.subr.mxu0 0.0
    %132 = vmatpush2.msra.mxu0 0.0
    %133 = vmatprep.subr.mxu0 0.0
    %134 = vmatpush2.msra.mxu0 0.0
    %135 = vmatprep.subr.mxu0 0.0
    %136 = vmatpush2.msra.mxu0 0.0
    %137 = vmatprep.subr.mxu0 0.0
    %138 = vmatpush2.msra.mxu0 0.0
    %139 = vmatprep.subr.mxu0 0.0
    %140 = vmatpush2.msra.mxu0 0.0
    %141 = vmatprep.subr.mxu0 0.0
    %142 = vmatpush2.msra.mxu0 0.0
    %143 = vmatprep.mubr.f32.mxu0 0.0
    %144 = vmatmul.mubr.f32.gmra.mxu0 %v72
    %v145 = vpop.f32.mrf.mxu0
    %v146 = vadd.f32 0.0, %v145
    %v147 = vpop.f32.mrf.mxu0
    %v148 = vadd.f32 0.0, %v147
    %149 = vdwg.mxu0
    %vm150 = vcmask 97280
    %v152 = vsel %vm150, %v61, 0
    %v155 = vsel %vm74, %v64, 0
    %v158 = vsel %vm74, %v65, 0
    %160 = vmatprep.subr.mxu0 0.0
    %161 = vmatpush1.msra.mxu0 0.0
    %162 = vmatprep.subr.mxu0 0.0
    %163 = vmatpush1.msra.mxu0 0.0
    %164 = vmatprep.subr.mxu0 0.0
    %165 = vmatpush1.msra.mxu0 0.0
    %166 = vmatprep.subr.mxu0 0.0
    %167 = vmatpush1.msra.mxu0 0.0
    %168 = vmatprep.subr.mxu0 0.0
    %169 = vmatpush1.msra.mxu0 0.0
    %170 = vmatprep.subr.mxu0 0.0
    %171 = vmatpush1.msra.mxu0 0.0
    %172 = vmatprep.subr.mxu0 0.0
    %173 = vmatpush1.msra.mxu0 0.0
    %174 = vmatprep.subr.mxu0 0.0
    %175 = vmatpush1.msra.mxu0 0.0
    %176 = vmatprep.subr.mxu0 0.0
    %177 = vmatpush1.msra.mxu0 0.0
    %178 = vmatprep.subr.mxu0 0.0
    %179 = vmatpush1.msra.mxu0 0.0
    %180 = vmatprep.subr.mxu0 0.0
    %181 = vmatpush1.msra.mxu0 0.0
    %182 = vmatprep.subr.mxu0 0.0
    %183 = vmatpush1.msra.mxu0 0.0
    %184 = vmatprep.subr.mxu0 0.0
    %185 = vmatpush1.msra.mxu0 0.0
    %186 = vmatprep.subr.mxu0 0.0
    %187 = vmatpush1.msra.mxu0 0.0
    %188 = vmatprep.subr.mxu0 %v158
    %189 = vmatpush1.msra.mxu0 %v155
    %190 = vmatprep.subr.mxu0 %v63
    %191 = vmatpush1.msra.mxu0 %v62
    %192 = vmatprep.subr.mxu0 0.0
    %193 = vmatpush2.msra.mxu0 0.0
    %194 = vmatprep.subr.mxu0 0.0
    %195 = vmatpush2.msra.mxu0 0.0
    %196 = vmatprep.subr.mxu0 0.0
    %197 = vmatpush2.msra.mxu0 0.0
    %198 = vmatprep.subr.mxu0 0.0
    %199 = vmatpush2.msra.mxu0 0.0
    %200 = vmatprep.subr.mxu0 0.0
    %201 = vmatpush2.msra.mxu0 0.0
    %202 = vmatprep.subr.mxu0 0.0
    %203 = vmatpush2.msra.mxu0 0.0
    %204 = vmatprep.subr.mxu0 0.0
    %205 = vmatpush2.msra.mxu0 0.0
    %206 = vmatprep.subr.mxu0 0.0
    %207 = vmatpush2.msra.mxu0 0.0
    %208 = vmatprep.subr.mxu0 0.0
    %209 = vmatpush2.msra.mxu0 0.0
    %210 = vmatprep.subr.mxu0 0.0
    %211 = vmatpush2.msra.mxu0 0.0
    %212 = vmatprep.subr.mxu0 0.0
    %213 = vmatpush2.msra.mxu0 0.0
    %214 = vmatprep.subr.mxu0 0.0
    %215 = vmatpush2.msra.mxu0 0.0
    %216 = vmatprep.subr.mxu0 0.0
    %217 = vmatpush2.msra.mxu0 0.0
    %218 = vmatprep.subr.mxu0 0.0
    %219 = vmatpush2.msra.mxu0 0.0
    %220 = vmatprep.subr.mxu0 0.0
    %221 = vmatpush2.msra.mxu0 0.0
    %222 = vmatprep.subr.mxu0 0.0
    %223 = vmatpush2.msra.mxu0 0.0
    %224 = vmatprep.mubr.f32.mxu0 0.0
    %225 = vmatmul.mubr.f32.gmra.mxu0 %v152
    %v226 = vpop.f32.mrf.mxu0
    %v227 = vadd.f32 %v146, %v226
    %v228 = vpop.f32.mrf.mxu0
    %v229 = vadd.f32 %v148, %v228
    %230 = vdwg.mxu0
    %v231 = vld [vmem:[%s4] sm:$0x3]
    %v233 = vlaneseq
    %v234 = vshrl.u32 %v233, 7
    %v235 = vsub.s32 0, %v234
    %v236 = vrot.slane %v231, %v235
    %v237 = vlaneseq
    %v238 = vshrl.u32 %v237, 7
    %v239 = vsub.s32 1, %v238
    %v240 = vrot.slane %v231, %v239
    %v243 = vadd.f32 %v227, %v236
    %v244 = vadd.f32 %v229, %v240
    %v245 = vmax.f32 %v243, 0.0
    %v246 = vmax.f32 %v244, 0.0
    %v247 = vld [vmem:[#allocation5] sm:$0xff]
    %v248 = vld [vmem:[#allocation5 + $0x8] sm:$0xff]
    %v249 = vld [vmem:[#allocation5 + $0x10] sm:$0xff]
    %v250 = vld [vmem:[#allocation5 + $0x18] sm:$0xff]
    %v251 = vld [vmem:[#allocation5 + $0x20] sm:$0xff]
    %v252 = vld [vmem:[#allocation5 + $0x28] sm:$0xff]
    %v253 = vld [vmem:[#allocation5 + $0x30] sm:$0xff]
    %v254 = vld [vmem:[#allocation5 + $0x38] sm:$0xff]
    %v255 = vld [vmem:[#allocation5 + $0x40] sm:$0xff]
    %v256 = vld [vmem:[#allocation5 + $0x48] sm:$0xff]
    %v257 = vld [vmem:[#allocation5 + $0x50] sm:$0xff]
    %v258 = vld [vmem:[#allocation5 + $0x58] sm:$0xff]
    %v259 = vld [vmem:[#allocation5 + $0x60] sm:$0xff]
    %v260 = vld [vmem:[#allocation5 + $0x68] sm:$0xff]
    %v261 = vld [vmem:[#allocation5 + $0x70] sm:$0xff]
    %v262 = vld [vmem:[#allocation5 + $0x78] sm:$0xff]
    %v263 = vld [vmem:[#allocation5 + $0x80] sm:$0xff]
    %v264 = vld [vmem:[#allocation5 + $0x88] sm:$0xff]
    %v265 = vld [vmem:[#allocation5 + $0x90] sm:$0xff]
    %v266 = vld [vmem:[#allocation5 + $0x98] sm:$0xff]
    %v267 = vld [vmem:[#allocation5 + $0xa0] sm:$0xff]
    %v268 = vld [vmem:[#allocation5 + $0xa8] sm:$0xff]
    %v269 = vld [vmem:[#allocation5 + $0xb0] sm:$0xff]
    %v270 = vld [vmem:[#allocation5 + $0xb8] sm:$0xff]
    %v271 = vld [vmem:[#allocation5 + $0xc0] sm:$0xff]
    %v272 = vld [vmem:[#allocation5 + $0xc8] sm:$0xff]
    %v273 = vld [vmem:[#allocation5 + $0xd0] sm:$0xff]
    %v274 = vld [vmem:[#allocation5 + $0xd8] sm:$0xff]
    %v275 = vld [vmem:[#allocation5 + $0xe0] sm:$0xff]
    %v276 = vld [vmem:[#allocation5 + $0xe8] sm:$0xff]
    %v277 = vld [vmem:[#allocation5 + $0xf0] sm:$0xff]
    %v278 = vld [vmem:[#allocation5 + $0xf8] sm:$0xff]
    %v279 = vld [vmem:[#allocation5 + $0x100] sm:$0xff]
    %v280 = vld [vmem:[#allocation5 + $0x108] sm:$0xff]
    %v281 = vld [vmem:[#allocation5 + $0x110] sm:$0xff]
    %v282 = vld [vmem:[#allocation5 + $0x118] sm:$0xff]
    %v283 = vld [vmem:[#allocation5 + $0x120] sm:$0xff]
    %v284 = vld [vmem:[#allocation5 + $0x128] sm:$0xff]
    %v285 = vld [vmem:[#allocation5 + $0x130] sm:$0xff]
    %v286 = vld [vmem:[#allocation5 + $0x138] sm:$0xff]
    %v287 = vld [vmem:[#allocation5 + $0x140] sm:$0xff]
    %v288 = vld [vmem:[#allocation5 + $0x148] sm:$0xff]
    %v289 = vld [vmem:[#allocation5 + $0x150] sm:$0xff]
    %v290 = vld [vmem:[#allocation5 + $0x158] sm:$0xff]
    %v291 = vld [vmem:[#allocation5 + $0x160] sm:$0xff]
    %v292 = vld [vmem:[#allocation5 + $0x168] sm:$0xff]
    %v293 = vld [vmem:[#allocation5 + $0x170] sm:$0xff]
    %v294 = vld [vmem:[#allocation5 + $0x178] sm:$0xff]
    %v295 = vld [vmem:[#allocation5 + $0x180] sm:$0xff]
    %v296 = vld [vmem:[#allocation5 + $0x188] sm:$0xff]
    %v297 = vld [vmem:[#allocation5 + $0x190] sm:$0xff]
    %v298 = vld [vmem:[#allocation5 + $0x198] sm:$0xff]
    %v299 = vld [vmem:[#allocation5 + $0x1a0] sm:$0xff]
    %v300 = vld [vmem:[#allocation5 + $0x1a8] sm:$0xff]
    %v301 = vld [vmem:[#allocation5 + $0x1b0] sm:$0xff]
    %v302 = vld [vmem:[#allocation5 + $0x1b8] sm:$0xff]
    %v303 = vld [vmem:[#allocation5 + $0x1c0] sm:$0xff]
    %v304 = vld [vmem:[#allocation5 + $0x1c8] sm:$0xff]
    %v305 = vld [vmem:[#allocation5 + $0x1d0] sm:$0xff]
    %v306 = vld [vmem:[#allocation5 + $0x1d8] sm:$0xff]
    %v307 = vld [vmem:[#allocation5 + $0x1e0] sm:$0xff]
    %v308 = vld [vmem:[#allocation5 + $0x1e8] sm:$0xff]
    %v309 = vld [vmem:[#allocation5 + $0x1f0] sm:$0xff]
    %v310 = vld [vmem:[#allocation5 + $0x1f8] sm:$0xff]
    %v311 = vld [vmem:[%s6] sm:$0x3]
    %v313 = vlaneseq
    %v314 = vshrl.u32 %v313, 7
    %v315 = vsub.s32 0, %v314
    %v316 = vrot.slane %v311, %v315
    %v317 = vlaneseq
    %v318 = vshrl.u32 %v317, 7
    %v319 = vsub.s32 1, %v318
    %v320 = vrot.slane %v311, %v319
    %323 = vmatprep.subr.mxu0 %v278
    %324 = vmatpush1.msra.mxu0 %v277
    %325 = vmatprep.subr.mxu0 %v276
    %326 = vmatpush1.msra.mxu0 %v275
    %327 = vmatprep.subr.mxu0 %v274
    %328 = vmatpush1.msra.mxu0 %v273
    %329 = vmatprep.subr.mxu0 %v272
    %330 = vmatpush1.msra.mxu0 %v271
    %331 = vmatprep.subr.mxu0 %v270
    %332 = vmatpush1.msra.mxu0 %v269
    %333 = vmatprep.subr.mxu0 %v268
    %334 = vmatpush1.msra.mxu0 %v267
    %335 = vmatprep.subr.mxu0 %v266
    %336 = vmatpush1.msra.mxu0 %v265
    %337 = vmatprep.subr.mxu0 %v264
    %338 = vmatpush1.msra.mxu0 %v263
    %339 = vmatprep.subr.mxu0 %v262
    %340 = vmatpush1.msra.mxu0 %v261
    %341 = vmatprep.subr.mxu0 %v260
    %342 = vmatpush1.msra.mxu0 %v259
    %343 = vmatprep.subr.mxu0 %v258
    %344 = vmatpush1.msra.mxu0 %v257
    %345 = vmatprep.subr.mxu0 %v256
    %346 = vmatpush1.msra.mxu0 %v255
    %347 = vmatprep.subr.mxu0 %v254
    %348 = vmatpush1.msra.mxu0 %v253
    %349 = vmatprep.subr.mxu0 %v252
    %350 = vmatpush1.msra.mxu0 %v251
    %351 = vmatprep.subr.mxu0 %v250
    %352 = vmatpush1.msra.mxu0 %v249
    %353 = vmatprep.subr.mxu0 %v248
    %354 = vmatpush1.msra.mxu0 %v247
    %355 = vmatprep.subr.mxu0 %v310
    %356 = vmatpush2.msra.mxu0 %v309
    %357 = vmatprep.subr.mxu0 %v308
    %358 = vmatpush2.msra.mxu0 %v307
    %359 = vmatprep.subr.mxu0 %v306
    %360 = vmatpush2.msra.mxu0 %v305
    %361 = vmatprep.subr.mxu0 %v304
    %362 = vmatpush2.msra.mxu0 %v303
    %363 = vmatprep.subr.mxu0 %v302
    %364 = vmatpush2.msra.mxu0 %v301
    %365 = vmatprep.subr.mxu0 %v300
    %366 = vmatpush2.msra.mxu0 %v299
    %367 = vmatprep.subr.mxu0 %v298
    %368 = vmatpush2.msra.mxu0 %v297
    %369 = vmatprep.subr.mxu0 %v296
    %370 = vmatpush2.msra.mxu0 %v295
    %371 = vmatprep.subr.mxu0 %v294
    %372 = vmatpush2.msra.mxu0 %v293
    %373 = vmatprep.subr.mxu0 %v292
    %374 = vmatpush2.msra.mxu0 %v291
    %375 = vmatprep.subr.mxu0 %v290
    %376 = vmatpush2.msra.mxu0 %v289
    %377 = vmatprep.subr.mxu0 %v288
    %378 = vmatpush2.msra.mxu0 %v287
    %379 = vmatprep.subr.mxu0 %v286
    %380 = vmatpush2.msra.mxu0 %v285
    %381 = vmatprep.subr.mxu0 %v284
    %382 = vmatpush2.msra.mxu0 %v283
    %383 = vmatprep.subr.mxu0 %v282
    %384 = vmatpush2.msra.mxu0 %v281
    %385 = vmatprep.subr.mxu0 %v280
    %386 = vmatpush2.msra.mxu0 %v279
    %387 = vmatprep.mubr.f32.mxu0 %v246
    %388 = vmatmul.mubr.f32.gmra.mxu0 %v245
    %v389 = vpop.f32.mrf.mxu0
    %v390 = vadd.f32 %v316, %v389
    %v391 = vpop.f32.mrf.mxu0
    %v392 = vadd.f32 %v320, %v391
    %393 = vdwg.mxu0
    %v394 = vmax.f32 %v390, 0.0
    %v395 = vmax.f32 %v392, 0.0
    %v396 = vld [vmem:[%s7] sm:$0x3]
    %v398 = vlaneseq
    %v399 = vshrl.u32 %v398, 7
    %v400 = vsub.s32 0, %v399
    %v401 = vrot.slane %v396, %v400
    %v402 = vlaneseq
    %v403 = vshrl.u32 %v402, 7
    %v404 = vsub.s32 1, %v403
    %v405 = vrot.slane %v396, %v404
    %v408 = vmul.f32 %v394, %v401
    %v409 = vmul.f32 %v395, %v405
    %v410 = vadd.f32 %v408, %v409
    %411 = vadd.xlane.f32.xlu0 %v410
    %v412 = vpop.xlane.xlu0 %411
    %s413 = sld [smem:[#allocation2]]
    %v414 = vstv %s413
    %v415 = vadd.f32 %v412, %v414
    %vm416 = vcmask 7168
    %417 = vst.msk [vmem:[%s9] sm:$0xff] %vm416, %v415
    // Predicated region
    $region46: #{tpu_custom_call.1} parent=1 // pred_check
      _
    $region47: #{tpu_custom_call.1} parent=1 // pred_check_branch
      %419 = sbr.rel (0) target = $region49
    $region48: #{tpu_custom_call.1} parent=1 // pred_region
      _
    $region49: #{tpu_custom_call.1} parent=1 // pred_fallthru
      _
    // Predicated region
    $region50: #{tpu_custom_call.1} parent=1 // pred_check
      _
    $region51: #{tpu_custom_call.1} parent=1 // pred_check_branch
      %421 = sbr.rel (0) target = $region53
    $region52: #{tpu_custom_call.1} parent=1 // pred_region
      _
    $region53: #{tpu_custom_call.1} parent=1 // pred_fallthru
      _
    %422 = vsyncpa [#allocation4], 1
    %423 = vsyncpa [#allocation6], 1

</llo_original>
